<compile_context>
chip_gen: v7x
topology: tpu7x:2x2x1
jax: 0.10.0
libtpu: 0.0.40
codegen_flags: <defaults>
</compile_context>

<pallas_src>
import numpy as np
import jax
import jax.numpy as jnp
from jax.experimental import pallas as pl
from jax.experimental.pallas import tpu as pltpu


_LANE_COLS = 1024       # lane-dense last dim (multiple of 128)
_MAX_BLOCK_ROWS = 512   # 512 x 1024 f32 = 2 MiB per block


def _copy_block_kernel(x_ref, o_ref):
    # Pure streaming copy of one (block_rows, 1024) tile.
    o_ref[...] = x_ref[...]


def clsf_loss_forward(x, *, use_pallas=True):
    """JAX equivalent of ClsfLoss.forward: returns x (same shape/dtype)."""
    if not use_pallas:
        # True fast path: identity is free and lets XLA fuse/alias through.
        return x

    orig_shape = x.shape
    total = x.size
    if total == 0:
        return x

    cols = _LANE_COLS
    n_rows = pl.cdiv(total, cols)

    # Pick a block height: 512 rows when there is enough data, otherwise a
    # full-array block (rows padded up to a sublane multiple of 8).
    if n_rows >= _MAX_BLOCK_ROWS:
        block_rows = _MAX_BLOCK_ROWS
    else:
        block_rows = max(8, ((n_rows + 7) // 8) * 8)

    rows_padded = pl.cdiv(n_rows, block_rows) * block_rows
    padded_total = rows_padded * cols

    flat = x.reshape(-1)
    if padded_total != total:
        flat = jnp.pad(flat, (0, padded_total - total))
    x2 = flat.reshape(rows_padded, cols)

    grid = (rows_padded // block_rows,)

    y2 = pl.pallas_call(
        _copy_block_kernel,
        out_shape=jax.ShapeDtypeStruct((rows_padded, cols), x.dtype),
        grid=grid,
        in_specs=[pl.BlockSpec((block_rows, cols), lambda i: (i, 0))],
        out_specs=pl.BlockSpec((block_rows, cols), lambda i: (i, 0)),
        compiler_params=pltpu.CompilerParams(
            dimension_semantics=("parallel",),
        ),
    )(x2)

    return y2.reshape(-1)[:total].reshape(orig_shape)


if __name__ == "__main__":
    key = jax.random.PRNGKey(0)
    # Small NCHW input consistent with a classification-loss style module.
    x = jax.random.normal(key, (2, 4, 16, 16), dtype=jnp.float32)

    # Host-side reference copy taken BEFORE the call (robust even if the input
    # were donated at the jit boundary in a real deployment).
    x_host = np.asarray(x)

    fwd = jax.jit(clsf_loss_forward)
    y = jax.block_until_ready(fwd(x))

    assert y.shape == x.shape and y.dtype == x.dtype
    np.testing.assert_array_equal(np.asarray(y), x_host)
    print("KERNEL_OK")
</pallas_src>

<mosaic_0001>
module attributes {stable_mosaic.version = 11 : i64} {
  func.func @_copy_block_kernel(%arg0: i32, %arg1: memref<8x1024xf32, #tpu.memory_space<vmem>>, %arg2: memref<8x1024xf32, #tpu.memory_space<vmem>>) attributes {dimension_semantics = [#tpu.dimension_semantics<parallel>], iteration_bounds = array<i64: 1>, scalar_prefetch = 0 : i64, scratch_operands = 0 : i64, tpu.core_type = #tpu.core_type<tc>, window_params = [{transform_indices = @transform_0, window_bounds = array<i64: 8, 1024>}, {transform_indices = @transform_1, window_bounds = array<i64: 8, 1024>}]} {
    %c0 = arith.constant 0 : index
    %c0_0 = arith.constant 0 : index
    %0 = vector.load %arg1[%c0, %c0_0] : memref<8x1024xf32, #tpu.memory_space<vmem>>, vector<8x1024xf32>
    %c0_1 = arith.constant 0 : index
    %c0_2 = arith.constant 0 : index
    %1 = vector.load %arg2[%c0_1, %c0_2] : memref<8x1024xf32, #tpu.memory_space<vmem>>, vector<8x1024xf32>
    tpu.vector_store %arg2[%c0_1, %c0_2], %0 {strides = array<i32>} : memref<8x1024xf32, #tpu.memory_space<vmem>>, vector<8x1024xf32>,
    return
  }
  func.func @transform_0(%arg0: i32) -> (i32, i32) {
    %c0_i32 = arith.constant 0 : i32
    %c0_i32_0 = arith.constant 0 : i32
    return %arg0, %c0_i32 : i32, i32
  }
  func.func @transform_1(%arg0: i32) -> (i32, i32) {
    %c0_i32 = arith.constant 0 : i32
    %c0_i32_0 = arith.constant 0 : i32
    return %arg0, %c0_i32 : i32, i32
  }
}

</mosaic_0001>

<llo_original>
// kernel: clsf_loss_forward.1
$region0: #{clsf_loss_forward.1}
  #allocation0 [shape = 'u32[]', space=smem, size = 0x4, offset = 0x4, fixed_abs, tag = 'smem constant byte address 0x4 - core index']
  #allocation1 [shape = 'u32[144,128]{1,0:T(1,128)}', space=vmem, size = 0x12000, scoped, tag = 'internal scratch']
  %s0 = inlined_call_operand.vmem [shape: f32[8,1024], index: 0, kind: input, shape index: {}]
  %s1 = inlined_call_operand.vmem [shape: f32[8,1024], index: 1, kind: output, shape index: {}]
  %s2 = sld [smem:[#allocation0]]
  $region14: #{clsf_loss_forward.1} parent=0
    _
  %s4 = ssub.s32 1, %s2
  %s5 = scalar_select 0, %s4, %s2
  // Predicated region
  $region2: #{clsf_loss_forward.1} parent=0 // pred_check
    _
  $region3: #{clsf_loss_forward.1} parent=0 // pred_check_branch
    %7 = sbr.rel (0) target = $region5
  $region4: #{clsf_loss_forward.1} parent=0 // pred_region
    _
  $region5: #{clsf_loss_forward.1} parent=0 // pred_fallthru
    _
  %v8 = vld [vmem:[%s0] sm:$0xff]
  %v9 = vld [vmem:[%s0 + $0x8] sm:$0xff]
  %v10 = vld [vmem:[%s0 + $0x10] sm:$0xff]
  %v11 = vld [vmem:[%s0 + $0x18] sm:$0xff]
  %v12 = vld [vmem:[%s0 + $0x20] sm:$0xff]
  %v13 = vld [vmem:[%s0 + $0x28] sm:$0xff]
  %v14 = vld [vmem:[%s0 + $0x30] sm:$0xff]
  %v15 = vld [vmem:[%s0 + $0x38] sm:$0xff]
  %16 = vst [vmem:[%s1] sm:$0xff] %v8
  %17 = vst [vmem:[%s1 + $0x8] sm:$0xff] %v9
  %18 = vst [vmem:[%s1 + $0x10] sm:$0xff] %v10
  %19 = vst [vmem:[%s1 + $0x18] sm:$0xff] %v11
  %20 = vst [vmem:[%s1 + $0x20] sm:$0xff] %v12
  %21 = vst [vmem:[%s1 + $0x28] sm:$0xff] %v13
  %22 = vst [vmem:[%s1 + $0x30] sm:$0xff] %v14
  %23 = vst [vmem:[%s1 + $0x38] sm:$0xff] %v15
  // Predicated region
  $region6: #{clsf_loss_forward.1} parent=0 // pred_check
    _
  $region7: #{clsf_loss_forward.1} parent=0 // pred_check_branch
    %25 = sbr.rel (0) target = $region9
  $region8: #{clsf_loss_forward.1} parent=0 // pred_region
    _
  $region9: #{clsf_loss_forward.1} parent=0 // pred_fallthru
    _
  // Predicated region
  $region10: #{clsf_loss_forward.1} parent=0 // pred_check
    _
  $region11: #{clsf_loss_forward.1} parent=0 // pred_check_branch
    %27 = sbr.rel (0) target = $region13
  $region12: #{clsf_loss_forward.1} parent=0 // pred_region
    _
  $region13: #{clsf_loss_forward.1} parent=0 // pred_fallthru
    _

</llo_original>
